<compile_context>
chip_gen: v5e
topology: v5e:2x2
jax: 0.10.0
libtpu: 0.0.40
codegen_flags: <defaults>
</compile_context>

<pallas_src>
import functools

import jax
import jax.numpy as jnp
from jax.experimental import pallas as pl
from jax.experimental.pallas import tpu as pltpu


_TARGET_TILE_BYTES = 4 * 1024 * 1024   # dense logits bytes per grid step (2-4 MiB sweet spot)
_VMEM_TILE_BUDGET = 28 * 1024 * 1024   # double-buffered blocks incl. lane padding
_VMEM_LIMIT_BYTES = 48 * 1024 * 1024   # explicit scoped-VMEM limit (v7x physical = 64 MiB)


def _bf16_eup_ok():
    """True on chips with a bf16 VPU/EUP path (v6e / v7x); False on v5e & older."""
    try:
        kind = jax.devices()[0].device_kind.lower()
    except Exception:
        return False
    return any(tag in kind for tag in ("v6", "v7", "7x"))


def _choose_block_rows(n, c, itemsize):
    """Rows per tile: ~_TARGET_TILE_BYTES of dense logits, capped by VMEM footprint."""
    sub = max(8, 32 // max(1, itemsize))               # sublane granule: 8 f32 / 16 bf16
    dense_row = c * itemsize                           # HBM bytes per row
    padded_row = ((c + 127) // 128) * 128 * itemsize   # VMEM bytes per row (lane-padded)
    # Double-buffered logits + targets(i32) + ce(f32); the (bn, 1) blocks lane-pad
    # to 128 in VMEM, which is what actually caps bn for small C.
    buf_row = 2 * padded_row + 2 * (128 * 4) + 2 * (128 * 4)
    bn = min(_TARGET_TILE_BYTES // dense_row, _VMEM_TILE_BUDGET // buf_row)
    bn = max(sub, (bn // sub) * sub)                   # round DOWN, never up past the cap
    return int(min(bn, n))


def _per_sample_ce_kernel(logits_ref, targets_ref, ce_ref, *, bf16_exp):
    """Per-row cross entropy for one batch tile; no cross-iteration state."""
    x = logits_ref[...]                                  # [bn, C] native dtype
    t = targets_ref[...]                                 # [bn, 1] int32
    col = jax.lax.broadcasted_iota(jnp.int32, x.shape, 1)
    one_hot = col == t                                   # [bn, C] bool

    if bf16_exp:
        # v6e / v7x with bf16 inputs: keep the EUP-bound exp (and the big tile
        # ops) in bf16; accumulate the exp-sum and per-row scalars in f32.
        row_max = jnp.max(x, axis=-1, keepdims=True)     # exact (it is an input value)
        sum_exp = jnp.sum(jnp.exp(x - row_max).astype(jnp.float32),
                          axis=-1, keepdims=True)
        # select + sum over a single nonzero is exact in bf16
        x_tgt = jnp.sum(jnp.where(one_hot, x, jnp.zeros_like(x)),
                        axis=-1, keepdims=True).astype(jnp.float32)
        row_max = row_max.astype(jnp.float32)
    else:
        # f32 inputs, or v5e (no bf16 VPU/EUP): all-f32 math.
        xf = x.astype(jnp.float32)
        row_max = jnp.max(xf, axis=-1, keepdims=True)
        sum_exp = jnp.sum(jnp.exp(xf - row_max), axis=-1, keepdims=True)
        x_tgt = jnp.sum(jnp.where(one_hot, xf, 0.0), axis=-1, keepdims=True)

    # ce_row = logsumexp(logits_row) - logits_row[target]
    ce_ref[...] = jnp.log(sum_exp) + row_max - x_tgt


def focal_loss(logits, targets, alpha=1.0, gamma=2.0, block_rows=None):
    """logits: [N, C] float32/bfloat16, targets: [N] int class ids -> f32 scalar."""
    n, c = logits.shape
    itemsize = jnp.dtype(logits.dtype).itemsize
    targets2d = targets.astype(jnp.int32).reshape(n, 1)

    if block_rows is None:
        bn = _choose_block_rows(n, c, itemsize)
    else:
        sub = max(8, 32 // max(1, itemsize))
        bn = min(int(block_rows), n)
        if bn < n:
            bn = min(max(sub, (bn // sub) * sub), n)    # sublane-friendly, never > n
    grid_n = pl.cdiv(n, bn)

    bf16_exp = (logits.dtype == jnp.bfloat16) and _bf16_eup_ok()
    kernel = functools.partial(_per_sample_ce_kernel, bf16_exp=bf16_exp)

    per_sample_ce = pl.pallas_call(
        kernel,
        out_shape=jax.ShapeDtypeStruct((n, 1), jnp.float32),
        grid=(grid_n,),
        in_specs=[
            pl.BlockSpec((bn, c), lambda i: (i, 0)),    # pipelined logits tiles
            pl.BlockSpec((bn, 1), lambda i: (i, 0)),    # pipelined target tiles
        ],
        out_specs=pl.BlockSpec((bn, 1), lambda i: (i, 0)),   # disjoint per-block CE rows
        compiler_params=pltpu.CompilerParams(
            dimension_semantics=("parallel",),          # v7x: 2 TCs split the grid
            vmem_limit_bytes=_VMEM_LIMIT_BYTES),
    )(logits, targets2d)

    # Tiny scalar epilogue in plain XLA: mean over the true N, then focal.
    ce = jnp.sum(per_sample_ce) / jnp.float32(n)
    pt = jnp.exp(-ce)
    one_minus_pt = jnp.maximum(1.0 - pt, 0.0)           # pt may round marginally above 1
    return jnp.float32(alpha) * one_minus_pt ** jnp.float32(gamma) * ce


def _focal_loss_ref(logits, targets, alpha=1.0, gamma=2.0):
    # Pure-JAX reference (matches the PyTorch module).
    logp = jax.nn.log_softmax(logits.astype(jnp.float32), axis=-1)
    ce = -jnp.mean(jnp.take_along_axis(logp, targets[:, None], axis=-1))
    pt = jnp.exp(-ce)
    return alpha * (1.0 - pt) ** gamma * ce


if __name__ == "__main__":
    key = jax.random.PRNGKey(0)
    k1, k2 = jax.random.split(key)

    # Non-divisible batch (100 = 3*32 + 4) exercises tiling + the partial tail block.
    N, C = 100, 32
    logits = jax.random.normal(k1, (N, C), dtype=jnp.float32)
    targets = jax.random.randint(k2, (N,), 0, C, dtype=jnp.int32)
    ref = _focal_loss_ref(logits, targets, alpha=1.0, gamma=2.0)

    # f32, forced small tiles -> multi-block grid with a masked/partial tail.
    out = jax.block_until_ready(
        focal_loss(logits, targets, alpha=1.0, gamma=2.0, block_rows=32))
    assert jnp.allclose(out, ref, rtol=1e-5, atol=1e-5), (out, ref)

    # f32, automatic byte-based tile sizing (single full-extent block here).
    out_auto = jax.block_until_ready(focal_loss(logits, targets, alpha=1.0, gamma=2.0))
    assert jnp.allclose(out_auto, ref, rtol=1e-5, atol=1e-5), (out_auto, ref)

    # bf16 logits: native-dtype DMA; bf16 EUP exp on v6e/v7x, all-f32 math on v5e.
    logits_bf16 = logits.astype(jnp.bfloat16)
    out_bf16 = jax.block_until_ready(
        focal_loss(logits_bf16, targets, alpha=1.0, gamma=2.0, block_rows=32))
    ref_bf16 = _focal_loss_ref(logits_bf16, targets, alpha=1.0, gamma=2.0)
    assert jnp.allclose(out_bf16, ref_bf16, rtol=2e-3, atol=2e-3), (out_bf16, ref_bf16)

    print("KERNEL_OK")
</pallas_src>

<mosaic_0001>
module attributes {stable_mosaic.version = 11 : i64} {
  func.func @_per_sample_ce_kernel(%arg0: i32, %arg1: memref<32x32xf32, #tpu.memory_space<vmem>>, %arg2: memref<32x1xi32, #tpu.memory_space<vmem>>, %arg3: memref<32x1xf32, #tpu.memory_space<vmem>>) attributes {dimension_semantics = [#tpu.dimension_semantics<parallel>], iteration_bounds = array<i64: 4>, scalar_prefetch = 0 : i64, scratch_operands = 0 : i64, tpu.core_type = #tpu.core_type<tc>, window_params = [{transform_indices = @transform_0, window_bounds = array<i64: 32, 32>}, {transform_indices = @transform_1, window_bounds = array<i64: 32, 1>}, {transform_indices = @transform_2, window_bounds = array<i64: 32, 1>}]} {
    %c0 = arith.constant 0 : index
    %c0_0 = arith.constant 0 : index
    %0 = vector.load %arg1[%c0, %c0_0] : memref<32x32xf32, #tpu.memory_space<vmem>>, vector<32x32xf32>
    %c0_1 = arith.constant 0 : index
    %c0_2 = arith.constant 0 : index
    %1 = vector.load %arg2[%c0_1, %c0_2] : memref<32x1xi32, #tpu.memory_space<vmem>>, vector<32x1xi32>
    %2 = tpu.iota {dimensions = array<i32: 1>} : vector<32x32xi32>
    %3 = vector.broadcast %1 : vector<32x1xi32> to vector<32x32xi32>
    %4 = arith.cmpi eq, %2, %3 : vector<32x32xi32>
    %cst = arith.constant dense<0xFF800000> : vector<32xf32>
    %5 = vector.multi_reduction <maximumf>, %0, %cst [1] : vector<32x32xf32> to vector<32xf32>
    %6 = vector.shape_cast %5 : vector<32xf32> to vector<32x1xf32>
    %7 = vector.broadcast %6 : vector<32x1xf32> to vector<32x32xf32>
    %8 = arith.subf %0, %7 : vector<32x32xf32>
    %9 = math.exp %8 : vector<32x32xf32>
    %cst_3 = arith.constant dense<0.000000e+00> : vector<32xf32>
    %10 = vector.multi_reduction <add>, %9, %cst_3 [1] : vector<32x32xf32> to vector<32xf32>
    %11 = vector.shape_cast %10 : vector<32xf32> to vector<32x1xf32>
    %cst_4 = arith.constant 0.000000e+00 : f32
    %12 = vector.broadcast %cst_4 : f32 to vector<32x32xf32>
    %13 = arith.select %4, %0, %12 : vector<32x32xi1>, vector<32x32xf32>
    %cst_5 = arith.constant dense<0.000000e+00> : vector<32xf32>
    %14 = vector.multi_reduction <add>, %13, %cst_5 [1] : vector<32x32xf32> to vector<32xf32>
    %15 = vector.shape_cast %14 : vector<32xf32> to vector<32x1xf32>
    %16 = math.log %11 : vector<32x1xf32>
    %17 = arith.addf %16, %6 : vector<32x1xf32>
    %18 = arith.subf %17, %15 : vector<32x1xf32>
    %c0_6 = arith.constant 0 : index
    %c0_7 = arith.constant 0 : index
    %19 = vector.load %arg3[%c0_6, %c0_7] : memref<32x1xf32, #tpu.memory_space<vmem>>, vector<32x1xf32>
    tpu.vector_store %arg3[%c0_6, %c0_7], %18 {strides = array<i32>} : memref<32x1xf32, #tpu.memory_space<vmem>>, vector<32x1xf32>,
    return
  }
  func.func @transform_0(%arg0: i32) -> (i32, i32) {
    %c0_i32 = arith.constant 0 : i32
    %c0_i32_0 = arith.constant 0 : i32
    return %arg0, %c0_i32 : i32, i32
  }
  func.func @transform_1(%arg0: i32) -> (i32, i32) {
    %c0_i32 = arith.constant 0 : i32
    %c0_i32_0 = arith.constant 0 : i32
    return %arg0, %c0_i32 : i32, i32
  }
  func.func @transform_2(%arg0: i32) -> (i32, i32) {
    %c0_i32 = arith.constant 0 : i32
    %c0_i32_0 = arith.constant 0 : i32
    return %arg0, %c0_i32 : i32, i32
  }
}

</mosaic_0001>

<llo_original>
// kernel: tpu_custom_call.1
$region0: #{tpu_custom_call.1}
  #allocation0 [shape = 'u32[]', space=smem, size = 0x4, offset = 0x4, fixed_abs, tag = 'smem constant byte address 0x4 - core index']
  #allocation1 [shape = 'u32[72,128]{1,0:T(1,128)}', space=vmem, size = 0x9000, scoped, tag = 'internal scratch']
  %s0 = inlined_call_operand.vmem [shape: f32[100,32], index: 0, kind: input, shape index: {}]
  %s1 = inlined_call_operand.vmem [shape: s32[100,1], index: 1, kind: input, shape index: {}]
  %s2 = inlined_call_operand.vmem [shape: f32[100,1], index: 2, kind: output, shape index: {}]
  %s3 = sld [smem:[#allocation0]]
  $region89: #{tpu_custom_call.1} parent=0
    _
  %s5 = ssub.s32 1, %s3
  %s6 = scalar_select 0, %s5, %s3
  $region1: #{tpu_custom_call.1} parent=0
    #allocation2 [shape = 'u8[32768]{0}', space=vmem, size = 0x8000, scoped, tag = 'output window, operand 0']
    loop: start=0, step=1, limit=6
    $region2: #{tpu_custom_call.1} parent=1 // loop_pre_header
      _
    $region3: #{tpu_custom_call.1} parent=1 // loop_header
      %s8 = sphi 0, %s12
      %p9 = scmp.ge.s32.totalorder %s8, 6
      %s18 = sphi 0, %s20
      %s21 = sphi 0, %s18
      %s22 = sphi 0, %s21
      %s38 = sphi 0, %s22
      %s44 = sphi 0, %s46
      %s47 = sphi 0, %s44
      %s48 = sphi 0, %s47
      %s64 = sphi 0, %s48
      %s70 = sphi 0, %s72
      %s73 = sphi 0, %s70
      %s74 = sphi 0, %s73
      %s90 = sphi 0, %s74
    $region4: #{tpu_custom_call.1} parent=1 // loop_header_branch
      %11 = sbr.rel (%p9) target = $region8
    $region5: #{tpu_custom_call.1} parent=1 // loop_body
      %s13 = ssub.s32 %s8, 1
      %s14 = ssub.s32 %s8, 2
      %s15 = sadd.s32 %s8, 1
      %s16 = ssub.s32 %s8, %s15
      %p17 = scmp.eq.s32.totalorder %s16, 0
      %s19 = sadd.s32 %s18, 1
      %s20 = scalar_select %p17, %s18, %s19
      %p23 = pneg %p17
      %p24 = scmp.eq.s32.totalorder %s8, 3
      %p25 = por %p23, %p24
      %p26 = scmp.ne.s32.totalorder %s18, %s21
      %p27 = scmp.eq.s32.totalorder %s8, 0
      %p28 = por %p26, %p27
      %p29 = scmp.ne.s32.totalorder %s18, %s21
      %p30 = scmp.eq.s32.totalorder %s13, 3
      %p31 = por %p29, %p30
      %p32 = scmp.ne.s32.totalorder %s21, %s22
      %p33 = scmp.eq.s32.totalorder %s13, 0
      %p34 = por %p32, %p33
      %p35 = scmp.ne.s32.totalorder %s21, %s22
      %p36 = scmp.eq.s32.totalorder %s14, 3
      %p37 = por %p35, %p36
      %p39 = scmp.ne.s32.totalorder %s22, %s38
      %p40 = scmp.eq.s32.totalorder %s14, 0
      %p41 = por %p39, %p40
      %s42 = ssub.s32 %s8, %s15
      %p43 = scmp.eq.s32.totalorder %s42, 0
      %s45 = sadd.s32 %s44, 1
      %s46 = scalar_select %p43, %s44, %s45
      %p49 = pneg %p43
      %p50 = scmp.eq.s32.totalorder %s8, 3
      %p51 = por %p49, %p50
      %p52 = scmp.ne.s32.totalorder %s44, %s47
      %p53 = scmp.eq.s32.totalorder %s8, 0
      %p54 = por %p52, %p53
      %p55 = scmp.ne.s32.totalorder %s44, %s47
      %p56 = scmp.eq.s32.totalorder %s13, 3
      %p57 = por %p55, %p56
      %p58 = scmp.ne.s32.totalorder %s47, %s48
      %p59 = scmp.eq.s32.totalorder %s13, 0
      %p60 = por %p58, %p59
      %p61 = scmp.ne.s32.totalorder %s47, %s48
      %p62 = scmp.eq.s32.totalorder %s14, 3
      %p63 = por %p61, %p62
      %p65 = scmp.ne.s32.totalorder %s48, %s64
      %p66 = scmp.eq.s32.totalorder %s14, 0
      %p67 = por %p65, %p66
      %s68 = ssub.s32 %s8, %s15
      %p69 = scmp.eq.s32.totalorder %s68, 0
      %s71 = sadd.s32 %s70, 1
      %s72 = scalar_select %p69, %s70, %s71
      %p75 = pneg %p69
      %p76 = scmp.eq.s32.totalorder %s8, 3
      %p77 = por %p75, %p76
      %p78 = scmp.ne.s32.totalorder %s70, %s73
      %p79 = scmp.eq.s32.totalorder %s8, 0
      %p80 = por %p78, %p79
      %p81 = scmp.ne.s32.totalorder %s70, %s73
      %p82 = scmp.eq.s32.totalorder %s13, 3
      %p83 = por %p81, %p82
      %p84 = scmp.ne.s32.totalorder %s73, %s74
      %p85 = scmp.eq.s32.totalorder %s13, 0
      %p86 = por %p84, %p85
      %p87 = scmp.ne.s32.totalorder %s73, %s74
      %p88 = scmp.eq.s32.totalorder %s14, 3
      %p89 = por %p87, %p88
      %p91 = scmp.ne.s32.totalorder %s74, %s90
      %p92 = scmp.eq.s32.totalorder %s14, 0
      %p93 = por %p91, %p92
      %p94 = scmp.le.s32.totalorder 1, %s8
      %p95 = scmp.lt.s32.totalorder %s8, 5
      %p96 = pnand %p94, %p95
      %p97 = pneg %p96
      // Predicated region
      $region9: #{tpu_custom_call.1} parent=5 // pred_check
        _
      $region10: #{tpu_custom_call.1} parent=5 // pred_check_branch
        %99 = sbr.rel (%p96) target = $region12
      $region11: #{tpu_custom_call.1} parent=5 // pred_region
        %s100 = ssub.s32 %s8, 1
      $region12: #{tpu_custom_call.1} parent=5 // pred_fallthru
        _
      %p101 = scmp.lt.s32.totalorder %s8, 4
      // Predicated region
      $region13: #{tpu_custom_call.1} parent=5 // pred_check
        %p102 = pneg %p101
      $region14: #{tpu_custom_call.1} parent=5 // pred_check_branch
        %104 = sbr.rel (%p102) target = $region16
      $region15: #{tpu_custom_call.1} parent=5 // pred_region
        // Predicated region
        $region17: #{tpu_custom_call.1} parent=15 // pred_check
          %p105 = pneg %p28
        $region18: #{tpu_custom_call.1} parent=15 // pred_check_branch
          %107 = sbr.rel (%p105) target = $region20
        $region19: #{tpu_custom_call.1} parent=15 // pred_region
          %s108 = smul.u32 4, %s8
          %s109 = ssub.s32 13, %s108
          %p110 = scmp.lt.s32.totalorder %s109, 4
          %s111 = scalar_select %p110, %s109, 4
          %s112 = smul.u32 8, %s111
          %p113 = scmp.lt.s32.totalorder %s108, 12
          %s114 = scalar_select %p113, %s108, 12
          %s115 = smul.addr %s114, 8
          %s116 = scalar_lea.vmem %s0, %s115
          %s117 = smul.u32 4, %s8
          %s118 = ssub.s32 13, %s117
          %p119 = scmp.lt.s32.totalorder %s118, 4
          %s120 = scalar_select %p119, %s118, 4
          %s121 = smul.u32 8, %s120
        $region20: #{tpu_custom_call.1} parent=15 // pred_fallthru
          _
        // Predicated region
        $region21: #{tpu_custom_call.1} parent=15 // pred_check
          %p122 = pneg %p54
        $region22: #{tpu_custom_call.1} parent=15 // pred_check_branch
          %124 = sbr.rel (%p122) target = $region24
        $region23: #{tpu_custom_call.1} parent=15 // pred_region
          %s125 = smul.u32 4, %s8
          %s126 = ssub.s32 13, %s125
          %p127 = scmp.lt.s32.totalorder %s126, 4
          %s128 = scalar_select %p127, %s126, 4
          %s129 = smul.u32 8, %s128
          %p130 = scmp.lt.s32.totalorder %s125, 12
          %s131 = scalar_select %p130, %s125, 12
          %s132 = smul.addr %s131, 8
          %s133 = scalar_lea.vmem %s1, %s132
          %s134 = smul.u32 4, %s8
          %s135 = ssub.s32 13, %s134
          %p136 = scmp.lt.s32.totalorder %s135, 4
          %s137 = scalar_select %p136, %s135, 4
          %s138 = smul.u32 8, %s137
        $region24: #{tpu_custom_call.1} parent=15 // pred_fallthru
          _
      $region16: #{tpu_custom_call.1} parent=5 // pred_fallthru
        _
      %p139 = scmp.le.s32.totalorder 1, %s8
      %p140 = scmp.lt.s32.totalorder %s8, 5
      %p141 = pnand %p139, %p140
      %p142 = pneg %p141
      // Predicated region
      $region25: #{tpu_custom_call.1} parent=5 // pred_check
        _
      $region26: #{tpu_custom_call.1} parent=5 // pred_check_branch
        %144 = sbr.rel (%p141) target = $region28
      $region27: #{tpu_custom_call.1} parent=5 // pred_region
        %s145 = ssub.s32 %s8, 1
        %s146 = smul.u32 4, %s13
        %s147 = ssub.s32 13, %s146
        %p148 = scmp.lt.s32.totalorder %s147, 4
        %s149 = scalar_select %p148, %s147, 4
        %s150 = smul.u32 8, %s149
        %p151 = scmp.lt.s32.totalorder %s146, 12
        %s152 = scalar_select %p151, %s146, 12
        %s153 = smul.addr %s152, 8
        %s154 = scalar_lea.vmem %s0, %s153
        %p155 = pneg %p34
        %p156 = pneg %p31
        %s157 = smul.u32 4, %s13
        %s158 = ssub.s32 13, %s157
        %p159 = scmp.lt.s32.totalorder %s158, 4
        %s160 = scalar_select %p159, %s158, 4
        %s161 = smul.u32 8, %s160
        %p162 = scmp.lt.s32.totalorder %s157, 12
        %s163 = scalar_select %p162, %s157, 12
        %s164 = smul.addr %s163, 8
        %s165 = scalar_lea.vmem %s1, %s164
        %p166 = pneg %p60
        %p167 = pneg %p57
        %p168 = pneg %p86
        %p169 = pneg %p83
        %s170 = sand.u32 %s73, 1
        %s171 = sand.u32 %s73, 1
        %s172 = smul.addr %s171, 32
        %s173 = scalar_lea.vmem [#allocation2], %s172
        %s174 = smul.u32 4, %s13
        %s175 = ssub.s32 13, %s174
        %p176 = scmp.lt.s32.totalorder %s175, 4
        %s177 = scalar_select %p176, %s175, 4
        %s178 = smul.u32 8, %s177
        %p179 = scmp.lt.s32.totalorder %s174, 12
        %s180 = scalar_select %p179, %s174, 12
        %s181 = smul.addr %s180, 8
        %s182 = scalar_lea.vmem %s0, %s181
        %s183 = smul.u32 4, %s13
        %s184 = ssub.s32 13, %s183
        %p185 = scmp.lt.s32.totalorder %s184, 4
        %s186 = scalar_select %p185, %s184, 4
        %s187 = smul.u32 8, %s186
        %s188 = smul.u32 4, %s13
        %s189 = ssub.s32 13, %s188
        %p190 = scmp.lt.s32.totalorder %s189, 4
        %s191 = scalar_select %p190, %s189, 4
        %s192 = smul.u32 8, %s191
        %p193 = scmp.lt.s32.totalorder %s188, 12
        %s194 = scalar_select %p193, %s188, 12
        %s195 = smul.addr %s194, 8
        %s196 = scalar_lea.vmem %s1, %s195
        %s197 = smul.u32 4, %s13
        %s198 = ssub.s32 13, %s197
        %p199 = scmp.lt.s32.totalorder %s198, 4
        %s200 = scalar_select %p199, %s198, 4
        %s201 = smul.u32 8, %s200
        %s202 = smul.u32 4, %s13
        %s203 = ssub.s32 13, %s202
        %p204 = scmp.lt.s32.totalorder %s203, 4
        %s205 = scalar_select %p204, %s203, 4
        %s206 = smul.u32 8, %s205
        %v207 = vld [vmem:[%s182] sm:$0xff]
        %v208 = vld [vmem:[%s182 + $0x8] sm:$0xff]
        %v209 = vld [vmem:[%s182 + $0x10] sm:$0xff]
        %v210 = vld [vmem:[%s182 + $0x18] sm:$0xff]
        %v211 = vld [vmem:[%s196] sm:$0xff]
        %v212 = vld [vmem:[%s196 + $0x8] sm:$0xff]
        %v213 = vld [vmem:[%s196 + $0x10] sm:$0xff]
        %v214 = vld [vmem:[%s196 + $0x18] sm:$0xff]
        %v215 = vlaneseq
        %v216 = vand.u32 %v215, 127
        %217 = vset.pattern.permute.xlu0 0
        %218 = vperm.xlu0 %217, %v211
        %v219 = vpop.permute.xlu0 %218
        %220 = vset.pattern.permute.xlu0 0
        %221 = vperm.xlu0 %220, %v212
        %v222 = vpop.permute.xlu0 %221
        %223 = vset.pattern.permute.xlu0 0
        %224 = vperm.xlu0 %223, %v213
        %v225 = vpop.permute.xlu0 %224
        %226 = vset.pattern.permute.xlu0 0
        %227 = vperm.xlu0 %226, %v214
        %v228 = vpop.permute.xlu0 %227
        %vm229 = vcmp.eq.s32.totalorder %v216, %v219
        %vm230 = vcmp.eq.s32.totalorder %v216, %v222
        %vm231 = vcmp.eq.s32.totalorder %v216, %v225
        %vm232 = vcmp.eq.s32.totalorder %v216, %v228
        %vm233 = vcmask 261120
        %v234 = vsel %vm233, %v207, -inf
        %235 = vmax.xlane.f32.xlu0 %v234
        %v236 = vpop.xlane.xlu0 %235
        %v237 = vsel %vm233, %v208, -inf
        %238 = vmax.xlane.f32.xlu0 %v237
        %v239 = vpop.xlane.xlu0 %238
        %v240 = vsel %vm233, %v209, -inf
        %241 = vmax.xlane.f32.xlu0 %v240
        %v242 = vpop.xlane.xlu0 %241
        %v243 = vsel %vm233, %v210, -inf
        %244 = vmax.xlane.f32.xlu0 %v243
        %v245 = vpop.xlane.xlu0 %244
        %v246 = vsub.f32 %v207, %v236
        %v247 = vsub.f32 %v208, %v239
        %v248 = vsub.f32 %v209, %v242
        %v249 = vsub.f32 %v210, %v245
        %v250 = vmul.f32 %v246, 1.442695
        %v251 = vpow.pop %v250
        %v252 = vmul.f32 %v247, 1.442695
        %v253 = vpow.pop %v252
        %v254 = vmul.f32 %v248, 1.442695
        %v255 = vpow.pop %v254
        %v256 = vmul.f32 %v249, 1.442695
        %v257 = vpow.pop %v256
        %v258 = vsel %vm233, %v251, 0.0
        %259 = vadd.xlane.f32.xlu0 %v258
        %v260 = vpop.xlane.xlu0 %259
        %v261 = vsel %vm233, %v253, 0.0
        %262 = vadd.xlane.f32.xlu0 %v261
        %v263 = vpop.xlane.xlu0 %262
        %v264 = vsel %vm233, %v255, 0.0
        %265 = vadd.xlane.f32.xlu0 %v264
        %v266 = vpop.xlane.xlu0 %265
        %v267 = vsel %vm233, %v257, 0.0
        %268 = vadd.xlane.f32.xlu0 %v267
        %v269 = vpop.xlane.xlu0 %268
        %v270 = vsel %vm229, %v207, 0.0
        %v271 = vsel %vm230, %v208, 0.0
        %v272 = vsel %vm231, %v209, 0.0
        %v273 = vsel %vm232, %v210, 0.0
        %v274 = vsel %vm233, %v270, 0.0
        %275 = vadd.xlane.f32.xlu0 %v274
        %v276 = vpop.xlane.xlu0 %275
        %v277 = vsel %vm233, %v271, 0.0
        %278 = vadd.xlane.f32.xlu0 %v277
        %v279 = vpop.xlane.xlu0 %278
        %v280 = vsel %vm233, %v272, 0.0
        %281 = vadd.xlane.f32.xlu0 %v280
        %v282 = vpop.xlane.xlu0 %281
        %v283 = vsel %vm233, %v273, 0.0
        %284 = vadd.xlane.f32.xlu0 %v283
        %v285 = vpop.xlane.xlu0 %284
        %v286 = vlog2.pop %v260
        %v287 = vmul.f32 %v286, 0.6931472
        %v288 = vlog2.pop %v263
        %v289 = vmul.f32 %v288, 0.6931472
        %v290 = vlog2.pop %v266
        %v291 = vmul.f32 %v290, 0.6931472
        %v292 = vlog2.pop %v269
        %v293 = vmul.f32 %v292, 0.6931472
        %v294 = vadd.f32 %v287, %v236
        %v295 = vadd.f32 %v289, %v239
        %v296 = vadd.f32 %v291, %v242
        %v297 = vadd.f32 %v293, %v245
        %v298 = vsub.f32 %v294, %v276
        %v299 = vsub.f32 %v295, %v279
        %v300 = vsub.f32 %v296, %v282
        %v301 = vsub.f32 %v297, %v285
        %vm302 = vcmask 7168
        %303 = vst.msk [vmem:[%s173] sm:$0xff] %vm302, %v298
        %304 = vst.msk [vmem:[%s173 + $0x8] sm:$0xff] %vm302, %v299
        %305 = vst.msk [vmem:[%s173 + $0x10] sm:$0xff] %vm302, %v300
        %306 = vst.msk [vmem:[%s173 + $0x18] sm:$0xff] %vm302, %v301
        %s307 = sand.u32 %s73, 1
        %s308 = sand.u32 %s73, 1
        %s309 = smul.addr %s308, 32
        %s310 = scalar_lea.vmem [#allocation2], %s309
        // Predicated region
        $region29: #{tpu_custom_call.1} parent=27 // pred_check
          %p311 = pneg %p83
        $region30: #{tpu_custom_call.1} parent=27 // pred_check_branch
          %313 = sbr.rel (%p311) target = $region32
        $region31: #{tpu_custom_call.1} parent=27 // pred_region
          %s314 = smul.u32 4, %s13
          %s315 = ssub.s32 13, %s314
          %p316 = scmp.lt.s32.totalorder %s315, 4
          %s317 = scalar_select %p316, %s315, 4
          %s318 = smul.u32 8, %s317
          %p319 = scmp.ne.s32.totalorder 0, %s318
          %s320 = smul.addr %s314, 8
          %s321 = scalar_lea.vmem %s2, %s320
          // Predicated region
          $region33: #{tpu_custom_call.1} parent=31 // pred_check
            %p322 = pneg %p319
          $region34: #{tpu_custom_call.1} parent=31 // pred_check_branch
            %324 = sbr.rel (%p322) target = $region36
          $region35: #{tpu_custom_call.1} parent=31 // pred_region
            // Predicated region
            $region37: #{tpu_custom_call.1} parent=35 // pred_check
              _
            $region38: #{tpu_custom_call.1} parent=35 // pred_check_branch
              %326 = sbr.rel (0) target = $region40
            $region39: #{tpu_custom_call.1} parent=35 // pred_region
              // Predicated region
              $region59: #{tpu_custom_call.1} parent=39 // pred_check
                _
              $region60: #{tpu_custom_call.1} parent=39 // pred_check_branch
                %382 = sbr.rel (0) target = $region62
              $region61: #{tpu_custom_call.1} parent=39 // pred_region
                %s383 = sshrl.u32 %s317, 2
                // While loop
                $region63: #{tpu_custom_call.1} parent=61 // loop_pre_header
                  _
                $region64: #{tpu_custom_call.1} parent=61 // loop_header
                  %s385 = sphi 0, %s387
                  %p386 = scmp.ge.s32.totalorder %s385, %s383
                  %s390 = sphi 0, %s403
                  %s391 = sphi %s310, %s406
                  %s392 = sphi %s321, %s407
                $region65: #{tpu_custom_call.1} parent=61 // loop_header_branch
                  %389 = sbr.rel (%p386) target = $region69
                $region66: #{tpu_custom_call.1} parent=61 // loop_body
                  %v393 = vld [vmem:[%s391] sm:$0xff]
                  %394 = vst [vmem:[%s392] sm:$0xff] %v393
                  %v395 = vld [vmem:[%s391 + $0x8] sm:$0xff]
                  %396 = vst [vmem:[%s392 + $0x8] sm:$0xff] %v395
                  %v397 = vld [vmem:[%s391 + $0x10] sm:$0xff]
                  %398 = vst [vmem:[%s392 + $0x10] sm:$0xff] %v397
                  %v399 = vld [vmem:[%s391 + $0x18] sm:$0xff]
                  %400 = vst [vmem:[%s392 + $0x18] sm:$0xff] %v399
                  %s401 = sadd.s32 1, %s390
                  %p402 = scmp.ge.s32.totalorder %s401, %s383
                  %s403 = scalar_select %p402, 0, %s401
                  %s404 = smul.u32 %s403, 32
                  %s405 = smul.u32 %s403, 32
                  %s406 = scalar_lea.vmem %s310, %s404 [#allocation2]
                  %s407 = scalar_lea.vmem %s321, %s405
                $region67: #{tpu_custom_call.1} parent=61 // loop_footer
                  %s387 = sadd.s32 %s385, 1
                $region68: #{tpu_custom_call.1} parent=61 // loop_footer_branch
                  %384 = sbr.rel target = $region64
                $region69: #{tpu_custom_call.1} parent=61 // loop_exit
                  _
                %s408 = sshrl.u32 %s317, 2
                %s409 = sand.u32 %s317, 3
                %s410 = smul.u32 %s408, 4
                %s411 = smul.u32 8, %s410
                %s412 = scalar_lea.vmem %s310, %s411 [#allocation2]
                %s413 = smul.u32 8, %s410
                %s414 = scalar_lea.vmem %s321, %s413
                // While loop
                $region70: #{tpu_custom_call.1} parent=61 // loop_pre_header
                  _
                $region71: #{tpu_custom_call.1} parent=61 // loop_header
                  %s416 = sphi 0, %s418
                  %p417 = scmp.ge.s32.totalorder %s416, %s409
                  %s421 = sphi 0, %s428
                  %s422 = sphi %s412, %s431
                  %s423 = sphi %s414, %s432
                $region72: #{tpu_custom_call.1} parent=61 // loop_header_branch
                  %420 = sbr.rel (%p417) target = $region76
                $region73: #{tpu_custom_call.1} parent=61 // loop_body
                  %v424 = vld [vmem:[%s422] sm:$0xff]
                  %425 = vst [vmem:[%s423] sm:$0xff] %v424
                  %s426 = sadd.s32 1, %s421
                  %p427 = scmp.ge.s32.totalorder %s426, %s409
                  %s428 = scalar_select %p427, 0, %s426
                  %s429 = smul.u32 %s428, 8
                  %s430 = smul.u32 %s428, 8
                  %s431 = scalar_lea.vmem %s412, %s429 [#allocation2]
                  %s432 = scalar_lea.vmem %s414, %s430
                $region74: #{tpu_custom_call.1} parent=61 // loop_footer
                  %s418 = sadd.s32 %s416, 1
                $region75: #{tpu_custom_call.1} parent=61 // loop_footer_branch
                  %415 = sbr.rel target = $region71
                $region76: #{tpu_custom_call.1} parent=61 // loop_exit
                  _
              $region62: #{tpu_custom_call.1} parent=39 // pred_fallthru
                _
              // Predicated region
              $region77: #{tpu_custom_call.1} parent=39 // pred_check
                _
              $region78: #{tpu_custom_call.1} parent=39 // pred_check_branch
                %434 = sbr.rel target = $region80
              $region79: #{tpu_custom_call.1} parent=39 // pred_region
                _
              $region80: #{tpu_custom_call.1} parent=39 // pred_fallthru
                _
            $region40: #{tpu_custom_call.1} parent=35 // pred_fallthru
              _
            // Predicated region
            $region41: #{tpu_custom_call.1} parent=35 // pred_check
              _
            $region42: #{tpu_custom_call.1} parent=35 // pred_check_branch
              %328 = sbr.rel target = $region44
            $region43: #{tpu_custom_call.1} parent=35 // pred_region
              %s330 = ssub.s32 256, 1
              %s331 = sshrl.u32 %s317, 2
              // While loop
              $region45: #{tpu_custom_call.1} parent=43 // loop_pre_header
                _
              $region46: #{tpu_custom_call.1} parent=43 // loop_header
                %s333 = sphi 0, %s335
                %p334 = scmp.ge.s32.totalorder %s333, %s331
                %s338 = sphi 0, %s351
                %s339 = sphi %s310, %s354
                %s340 = sphi %s321, %s355
              $region47: #{tpu_custom_call.1} parent=43 // loop_header_branch
                %337 = sbr.rel (%p334) target = $region51
              $region48: #{tpu_custom_call.1} parent=43 // loop_body
                %v341 = vld [vmem:[%s339] sm:%s330]
                %342 = vst [vmem:[%s340] sm:%s330] %v341
                %v343 = vld [vmem:[%s339 + $0x8] sm:%s330]
                %344 = vst [vmem:[%s340 + $0x8] sm:%s330] %v343
                %v345 = vld [vmem:[%s339 + $0x10] sm:%s330]
                %346 = vst [vmem:[%s340 + $0x10] sm:%s330] %v345
                %v347 = vld [vmem:[%s339 + $0x18] sm:%s330]
                %348 = vst [vmem:[%s340 + $0x18] sm:%s330] %v347
                %s349 = sadd.s32 1, %s338
                %p350 = scmp.ge.s32.totalorder %s349, %s331
                %s351 = scalar_select %p350, 0, %s349
                %s352 = smul.u32 %s351, 32
                %s353 = smul.u32 %s351, 32
                %s354 = scalar_lea.vmem %s310, %s352 [#allocation2]
                %s355 = scalar_lea.vmem %s321, %s353
              $region49: #{tpu_custom_call.1} parent=43 // loop_footer
                %s335 = sadd.s32 %s333, 1
              $region50: #{tpu_custom_call.1} parent=43 // loop_footer_branch
                %332 = sbr.rel target = $region46
              $region51: #{tpu_custom_call.1} parent=43 // loop_exit
                _
              %s356 = sshrl.u32 %s317, 2
              %s357 = sand.u32 %s317, 3
              %s358 = smul.u32 %s356, 4
              %s359 = smul.u32 8, %s358
              %s360 = scalar_lea.vmem %s310, %s359 [#allocation2]
              %s361 = smul.u32 8, %s358
              %s362 = scalar_lea.vmem %s321, %s361
              // While loop
              $region52: #{tpu_custom_call.1} parent=43 // loop_pre_header
                _
              $region53: #{tpu_custom_call.1} parent=43 // loop_header
                %s364 = sphi 0, %s366
                %p365 = scmp.ge.s32.totalorder %s364, %s357
                %s369 = sphi 0, %s376
                %s370 = sphi %s360, %s379
                %s371 = sphi %s362, %s380
              $region54: #{tpu_custom_call.1} parent=43 // loop_header_branch
                %368 = sbr.rel (%p365) target = $region58
              $region55: #{tpu_custom_call.1} parent=43 // loop_body
                %v372 = vld [vmem:[%s370] sm:%s330]
                %373 = vst [vmem:[%s371] sm:%s330] %v372
                %s374 = sadd.s32 1, %s369
                %p375 = scmp.ge.s32.totalorder %s374, %s357
                %s376 = scalar_select %p375, 0, %s374
                %s377 = smul.u32 %s376, 8
                %s378 = smul.u32 %s376, 8
                %s379 = scalar_lea.vmem %s360, %s377 [#allocation2]
                %s380 = scalar_lea.vmem %s362, %s378
              $region56: #{tpu_custom_call.1} parent=43 // loop_footer
                %s366 = sadd.s32 %s364, 1
              $region57: #{tpu_custom_call.1} parent=43 // loop_footer_branch
                %363 = sbr.rel target = $region53
              $region58: #{tpu_custom_call.1} parent=43 // loop_exit
                _
            $region44: #{tpu_custom_call.1} parent=35 // pred_fallthru
              _
          $region36: #{tpu_custom_call.1} parent=31 // pred_fallthru
            _
          %435 = vnop
        $region32: #{tpu_custom_call.1} parent=27 // pred_fallthru
          _
      $region28: #{tpu_custom_call.1} parent=5 // pred_fallthru
        _
      %p436 = scmp.le.s32.totalorder 2, %s8
      // Predicated region
      $region81: #{tpu_custom_call.1} parent=5 // pred_check
        %p437 = pneg %p436
      $region82: #{tpu_custom_call.1} parent=5 // pred_check_branch
        %439 = sbr.rel (%p437) target = $region84
      $region83: #{tpu_custom_call.1} parent=5 // pred_region
        %s440 = ssub.s32 %s8, 2
        // Predicated region
        $region85: #{tpu_custom_call.1} parent=83 // pred_check
          %p441 = pneg %p89
        $region86: #{tpu_custom_call.1} parent=83 // pred_check_branch
          %443 = sbr.rel (%p441) target = $region88
        $region87: #{tpu_custom_call.1} parent=83 // pred_region
          %s444 = sand.u32 %s74, 1
          %s445 = sand.u32 %s74, 1
          %s446 = smul.addr %s445, 32
          %s447 = scalar_lea.vmem [#allocation2], %s446
        $region88: #{tpu_custom_call.1} parent=83 // pred_fallthru
          _
      $region84: #{tpu_custom_call.1} parent=5 // pred_fallthru
        _
    $region6: #{tpu_custom_call.1} parent=1 // loop_footer
      %s12 = sadd.s32 1, %s8
    $region7: #{tpu_custom_call.1} parent=1 // loop_footer_branch
      %7 = sbr.rel target = $region3
    $region8: #{tpu_custom_call.1} parent=1 // loop_exit
      _

</llo_original>
